<compile_context>
chip_gen: v7x
topology: tpu7x:2x2x1
jax: 0.10.0
libtpu: 0.0.40
codegen_flags: <defaults>
</compile_context>

<pallas_src>
import jax
import jax.numpy as jnp
from jax import lax
from jax.experimental import pallas as pl
from jax.experimental.pallas import tpu as pltpu


def _round_up(x, m):
    return ((x + m - 1) // m) * m


def _noisy_rnn_kernel(pre_ref, noise_ref, whh_ref, states_ref, final_ref,
                      h_scratch):
    """One grid step processes a block of Tc timesteps.

    pre_ref    : (Tc, Bp, Hp)  precomputed x_t @ W_ih^T + (b_ih + b_hh)
    noise_ref  : (Tc, Bp, Hp)  Gaussian noise per timestep
    whh_ref    : (Hp, Hp)      W_hh^T (constant across the grid)
    states_ref : (Tc, Bp, Hp)  hidden states for this time block
    final_ref  : (Bp, Hp)      final hidden state (written on last block)
    h_scratch  : (Bp, Hp) f32  hidden state carried across grid steps
    """
    blk = pl.program_id(0)

    @pl.when(blk == 0)
    def _():
        h_scratch[...] = jnp.zeros_like(h_scratch)

    tc = pre_ref.shape[0]
    w = whh_ref[...]                 # load weight once per time block

    def step(t, h):
        # state = state + noise_t ; state = tanh(pre_t + state @ W_hh^T)
        h = h + noise_ref[t]
        h_new = jnp.tanh(pre_ref[t]
                         + jnp.dot(h, w, preferred_element_type=jnp.float32))
        states_ref[t] = h_new.astype(states_ref.dtype)
        return h_new

    # Short, fixed trip-count recurrence: fully unroll for LLO visibility.
    h_final = lax.fori_loop(0, tc, step, h_scratch[...], unroll=True)
    h_scratch[...] = h_final

    @pl.when(blk == pl.num_programs(0) - 1)
    def _():
        final_ref[...] = h_final.astype(final_ref.dtype)


def noisy_rnn_forward(inputs, w_ih, w_hh, b_ih, b_hh, noise, *, tc_max=16):
    """inputs: (B, T, D) f32, noise: (B, T, H) f32.
    w_ih: (H, D), w_hh: (H, H), b_ih/b_hh: (H,).
    Returns (states (B, T, H), final_state (B, H))."""
    B, T, D = inputs.shape
    H = w_ih.shape[0]

    if T == 0:  # guard: final state is defined as the zero init
        return (jnp.zeros((B, 0, H), jnp.float32),
                jnp.zeros((B, H), jnp.float32))

    # Hoist the non-recurrent matmul out of the kernel: one large,
    # MXU-efficient (T*B, D) @ (D, H) matmul instead of T tiny in-kernel pushes.
    bias = (b_ih + b_hh).astype(jnp.float32)
    pre = jnp.einsum("btd,dh->bth", inputs, w_ih.T,
                     precision=lax.Precision.HIGHEST) + bias        # (B, T, H)

    # Time-major for the sequential kernel.
    pre_tm = jnp.transpose(pre, (1, 0, 2))        # (T, B, H)
    noise_tm = jnp.transpose(noise, (1, 0, 2))    # (T, B, H)
    whh_t = w_hh.T                                # (H, H)

    # Pad to vreg/MXU-friendly shapes: B -> multiple of 8 (sublane),
    # H -> multiple of 128 (lane).  Zero padding keeps the recurrence exact.
    Bp = _round_up(max(B, 8), 8)
    Hp = _round_up(max(H, 128), 128)
    pre_p = jnp.pad(pre_tm, ((0, 0), (0, Bp - B), (0, Hp - H)))
    noise_p = jnp.pad(noise_tm, ((0, 0), (0, Bp - B), (0, Hp - H)))
    whh_p = jnp.pad(whh_t, ((0, Hp - H), (0, Hp - H)))

    # Time-block size: largest divisor of T that is <= tc_max (keeps the
    # double-buffered (Tc, Bp, Hp) slabs well under the scoped VMEM limit on
    # v7x's 64 MiB while amortizing per-grid-step overhead).
    tc = 1
    for cand in range(min(T, tc_max), 0, -1):
        if T % cand == 0:
            tc = cand
            break

    states_p, final_p = pl.pallas_call(
        _noisy_rnn_kernel,
        out_shape=(
            jax.ShapeDtypeStruct((T, Bp, Hp), jnp.float32),
            jax.ShapeDtypeStruct((Bp, Hp), jnp.float32),
        ),
        grid_spec=pltpu.PrefetchScalarGridSpec(
            num_scalar_prefetch=0,
            grid=(T // tc,),
            in_specs=[
                pl.BlockSpec((tc, Bp, Hp), lambda i: (i, 0, 0)),  # pre-activations
                pl.BlockSpec((tc, Bp, Hp), lambda i: (i, 0, 0)),  # noise
                # TODO(synk): for very large H, single-buffer this constant
                # block (pipeline_mode=pl.Buffered(1)) to halve its VMEM cost.
                pl.BlockSpec((Hp, Hp), lambda i: (0, 0)),         # W_hh^T (constant)
            ],
            out_specs=[
                pl.BlockSpec((tc, Bp, Hp), lambda i: (i, 0, 0)),  # states
                pl.BlockSpec((Bp, Hp), lambda i: (0, 0)),         # final state
            ],
            scratch_shapes=[pltpu.VMEM((Bp, Hp), jnp.float32)],
        ),
        compiler_params=pltpu.CompilerParams(
            dimension_semantics=("arbitrary",)),   # sequential recurrence in time
    )(pre_p, noise_p, whh_p)

    states = jnp.transpose(states_p, (1, 0, 2))[:B, :, :H]   # (B, T, H)
    final = final_p[:B, :H]                                  # (B, H)
    return states, final


def init_params(key, input_dim, hidden_dim):
    """Deterministic init matching torch.nn.RNNCell: U(-1/sqrt(H), 1/sqrt(H))."""
    k1, k2, k3, k4 = jax.random.split(key, 4)
    bound = 1.0 / jnp.sqrt(jnp.float32(hidden_dim))
    w_ih = jax.random.uniform(k1, (hidden_dim, input_dim), jnp.float32, -bound, bound)
    w_hh = jax.random.uniform(k2, (hidden_dim, hidden_dim), jnp.float32, -bound, bound)
    b_ih = jax.random.uniform(k3, (hidden_dim,), jnp.float32, -bound, bound)
    b_hh = jax.random.uniform(k4, (hidden_dim,), jnp.float32, -bound, bound)
    return w_ih, w_hh, b_ih, b_hh


if __name__ == "__main__":
    B, T, D, H = 2, 8, 4, 32
    STD = 0.1

    key = jax.random.PRNGKey(0)
    k_params, k_x, k_noise = jax.random.split(key, 3)

    w_ih, w_hh, b_ih, b_hh = init_params(k_params, D, H)
    x = jax.random.normal(k_x, (B, T, D), jnp.float32)
    # Gaussian noise with mean 0, std = self._std, added to the hidden state
    # each timestep before the cell update (torch.normal per step in the spec).
    noise = STD * jax.random.normal(k_noise, (B, T, H), jnp.float32)

    states, final_state = noisy_rnn_forward(x, w_ih, w_hh, b_ih, b_hh, noise)
    jax.block_until_ready((states, final_state))

    # Pure-JAX reference check of the recurrence semantics.
    def ref(x, noise):
        h = jnp.zeros((B, H), jnp.float32)
        outs = []
        for t in range(T):
            h = h + noise[:, t, :]
            h = jnp.tanh(
                jnp.dot(x[:, t, :], w_ih.T, precision=lax.Precision.HIGHEST)
                + b_ih
                + jnp.dot(h, w_hh.T, precision=lax.Precision.HIGHEST)
                + b_hh)
            outs.append(h)
        return jnp.stack(outs, axis=1), h

    ref_states, ref_final = ref(x, noise)
    assert states.shape == (B, T, H) and final_state.shape == (B, H)
    assert jnp.allclose(states, ref_states, atol=1e-4), "states mismatch"
    assert jnp.allclose(final_state, ref_final, atol=1e-4), "final state mismatch"

    print("KERNEL_OK")
</pallas_src>

<mosaic_0001>
module attributes {stable_mosaic.version = 11 : i64} {
  func.func @_noisy_rnn_kernel(%arg0: i32, %arg1: memref<8x8x128xf32, #tpu.memory_space<vmem>>, %arg2: memref<8x8x128xf32, #tpu.memory_space<vmem>>, %arg3: memref<128x128xf32, #tpu.memory_space<vmem>>, %arg4: memref<8x8x128xf32, #tpu.memory_space<vmem>>, %arg5: memref<8x128xf32, #tpu.memory_space<vmem>>, %arg6: memref<8x128xf32, #tpu.memory_space<vmem>>) attributes {dimension_semantics = [#tpu.dimension_semantics<arbitrary>], iteration_bounds = array<i64: 1>, scalar_prefetch = 0 : i64, scratch_operands = 1 : i64, tpu.core_type = #tpu.core_type<tc>, window_params = [{transform_indices = @transform_0, window_bounds = array<i64: 8, 8, 128>}, {transform_indices = @transform_1, window_bounds = array<i64: 8, 8, 128>}, {pipeline_mode = #tpu.pipeline_mode<synchronous>, transform_indices = @transform_2, window_bounds = array<i64: 128, 128>}, {transform_indices = @transform_3, window_bounds = array<i64: 8, 8, 128>}, {pipeline_mode = #tpu.pipeline_mode<synchronous>, transform_indices = @transform_4, window_bounds = array<i64: 8, 128>}]} {
    %c0_i32 = arith.constant 0 : i32
    %0 = arith.cmpi eq, %arg0, %c0_i32 : i32
    %1 = arith.extui %0 : i1 to i32
    %c0_i32_0 = arith.constant 0 : i32
    %2 = arith.cmpi ne, %1, %c0_i32_0 : i32
    scf.if %2 {
      %cst_64 = arith.constant 0.000000e+00 : f32
      %121 = vector.broadcast %cst_64 : f32 to vector<8x128xf32>
      %c0_65 = arith.constant 0 : index
      %c0_66 = arith.constant 0 : index
      %122 = vector.load %arg6[%c0_65, %c0_66] : memref<8x128xf32, #tpu.memory_space<vmem>>, vector<8x128xf32>
      tpu.vector_store %arg6[%c0_65, %c0_66], %121 {strides = array<i32>} : memref<8x128xf32, #tpu.memory_space<vmem>>, vector<8x128xf32>,
    } else {
    }
    %c0 = arith.constant 0 : index
    %c0_1 = arith.constant 0 : index
    %3 = vector.load %arg3[%c0, %c0_1] : memref<128x128xf32, #tpu.memory_space<vmem>>, vector<128x128xf32>
    %c0_2 = arith.constant 0 : index
    %c0_3 = arith.constant 0 : index
    %4 = vector.load %arg6[%c0_2, %c0_3] : memref<8x128xf32, #tpu.memory_space<vmem>>, vector<8x128xf32>
    %c0_i32_4 = arith.constant 0 : i32
    %5 = arith.index_cast %c0_i32_4 : i32 to index
    %c0_5 = arith.constant 0 : index
    %c0_6 = arith.constant 0 : index
    %6 = vector.load %arg2[%5, %c0_5, %c0_6] : memref<8x8x128xf32, #tpu.memory_space<vmem>>, vector<1x8x128xf32>
    %7 = vector.shape_cast %6 : vector<1x8x128xf32> to vector<8x128xf32>
    %8 = arith.addf %4, %7 : vector<8x128xf32>
    %9 = arith.index_cast %c0_i32_4 : i32 to index
    %c0_7 = arith.constant 0 : index
    %c0_8 = arith.constant 0 : index
    %10 = vector.load %arg1[%9, %c0_7, %c0_8] : memref<8x8x128xf32, #tpu.memory_space<vmem>>, vector<1x8x128xf32>
    %11 = vector.shape_cast %10 : vector<1x8x128xf32> to vector<8x128xf32>
    %cst = arith.constant dense<0.000000e+00> : vector<8x128xf32>
    %12 = tpu.matmul %8, %3, %cst {dimension_numbers = #tpu.dot_dimension_numbers<[1], [0], [0], [1], [0, 0, 1, 1], [], []>} : vector<8x128xf32>, vector<128x128xf32>, vector<8x128xf32> -> vector<8x128xf32>
    %13 = arith.addf %11, %12 : vector<8x128xf32>
    %14 = math.tanh %13 : vector<8x128xf32>
    %15 = arith.index_cast %c0_i32_4 : i32 to index
    %c0_9 = arith.constant 0 : index
    %c0_10 = arith.constant 0 : index
    %16 = vector.load %arg4[%15, %c0_9, %c0_10] : memref<8x8x128xf32, #tpu.memory_space<vmem>>, vector<1x8x128xf32>
    %17 = vector.shape_cast %16 : vector<1x8x128xf32> to vector<8x128xf32>
    %18 = vector.shape_cast %14 : vector<8x128xf32> to vector<1x8x128xf32>
    tpu.vector_store %arg4[%15, %c0_9, %c0_10], %18 {strides = array<i32>} : memref<8x8x128xf32, #tpu.memory_space<vmem>>, vector<1x8x128xf32>,
    %c1_i32 = arith.constant 1 : i32
    %19 = arith.index_cast %c1_i32 : i32 to index
    %c0_11 = arith.constant 0 : index
    %c0_12 = arith.constant 0 : index
    %20 = vector.load %arg2[%19, %c0_11, %c0_12] : memref<8x8x128xf32, #tpu.memory_space<vmem>>, vector<1x8x128xf32>
    %21 = vector.shape_cast %20 : vector<1x8x128xf32> to vector<8x128xf32>
    %22 = arith.addf %14, %21 : vector<8x128xf32>
    %23 = arith.index_cast %c1_i32 : i32 to index
    %c0_13 = arith.constant 0 : index
    %c0_14 = arith.constant 0 : index
    %24 = vector.load %arg1[%23, %c0_13, %c0_14] : memref<8x8x128xf32, #tpu.memory_space<vmem>>, vector<1x8x128xf32>
    %25 = vector.shape_cast %24 : vector<1x8x128xf32> to vector<8x128xf32>
    %cst_15 = arith.constant dense<0.000000e+00> : vector<8x128xf32>
    %26 = tpu.matmul %22, %3, %cst_15 {dimension_numbers = #tpu.dot_dimension_numbers<[1], [0], [0], [1], [0, 0, 1, 1], [], []>} : vector<8x128xf32>, vector<128x128xf32>, vector<8x128xf32> -> vector<8x128xf32>
    %27 = arith.addf %25, %26 : vector<8x128xf32>
    %28 = math.tanh %27 : vector<8x128xf32>
    %29 = arith.index_cast %c1_i32 : i32 to index
    %c0_16 = arith.constant 0 : index
    %c0_17 = arith.constant 0 : index
    %30 = vector.load %arg4[%29, %c0_16, %c0_17] : memref<8x8x128xf32, #tpu.memory_space<vmem>>, vector<1x8x128xf32>
    %31 = vector.shape_cast %30 : vector<1x8x128xf32> to vector<8x128xf32>
    %32 = vector.shape_cast %28 : vector<8x128xf32> to vector<1x8x128xf32>
    tpu.vector_store %arg4[%29, %c0_16, %c0_17], %32 {strides = array<i32>} : memref<8x8x128xf32, #tpu.memory_space<vmem>>, vector<1x8x128xf32>,
    %c2_i32 = arith.constant 2 : i32
    %33 = arith.index_cast %c2_i32 : i32 to index
    %c0_18 = arith.constant 0 : index
    %c0_19 = arith.constant 0 : index
    %34 = vector.load %arg2[%33, %c0_18, %c0_19] : memref<8x8x128xf32, #tpu.memory_space<vmem>>, vector<1x8x128xf32>
    %35 = vector.shape_cast %34 : vector<1x8x128xf32> to vector<8x128xf32>
    %36 = arith.addf %28, %35 : vector<8x128xf32>
    %37 = arith.index_cast %c2_i32 : i32 to index
    %c0_20 = arith.constant 0 : index
    %c0_21 = arith.constant 0 : index
    %38 = vector.load %arg1[%37, %c0_20, %c0_21] : memref<8x8x128xf32, #tpu.memory_space<vmem>>, vector<1x8x128xf32>
    %39 = vector.shape_cast %38 : vector<1x8x128xf32> to vector<8x128xf32>
    %cst_22 = arith.constant dense<0.000000e+00> : vector<8x128xf32>
    %40 = tpu.matmul %36, %3, %cst_22 {dimension_numbers = #tpu.dot_dimension_numbers<[1], [0], [0], [1], [0, 0, 1, 1], [], []>} : vector<8x128xf32>, vector<128x128xf32>, vector<8x128xf32> -> vector<8x128xf32>
    %41 = arith.addf %39, %40 : vector<8x128xf32>
    %42 = math.tanh %41 : vector<8x128xf32>
    %43 = arith.index_cast %c2_i32 : i32 to index
    %c0_23 = arith.constant 0 : index
    %c0_24 = arith.constant 0 : index
    %44 = vector.load %arg4[%43, %c0_23, %c0_24] : memref<8x8x128xf32, #tpu.memory_space<vmem>>, vector<1x8x128xf32>
    %45 = vector.shape_cast %44 : vector<1x8x128xf32> to vector<8x128xf32>
    %46 = vector.shape_cast %42 : vector<8x128xf32> to vector<1x8x128xf32>
    tpu.vector_store %arg4[%43, %c0_23, %c0_24], %46 {strides = array<i32>} : memref<8x8x128xf32, #tpu.memory_space<vmem>>, vector<1x8x128xf32>,
    %c3_i32 = arith.constant 3 : i32
    %47 = arith.index_cast %c3_i32 : i32 to index
    %c0_25 = arith.constant 0 : index
    %c0_26 = arith.constant 0 : index
    %48 = vector.load %arg2[%47, %c0_25, %c0_26] : memref<8x8x128xf32, #tpu.memory_space<vmem>>, vector<1x8x128xf32>
    %49 = vector.shape_cast %48 : vector<1x8x128xf32> to vector<8x128xf32>
    %50 = arith.addf %42, %49 : vector<8x128xf32>
    %51 = arith.index_cast %c3_i32 : i32 to index
    %c0_27 = arith.constant 0 : index
    %c0_28 = arith.constant 0 : index
    %52 = vector.load %arg1[%51, %c0_27, %c0_28] : memref<8x8x128xf32, #tpu.memory_space<vmem>>, vector<1x8x128xf32>
    %53 = vector.shape_cast %52 : vector<1x8x128xf32> to vector<8x128xf32>
    %cst_29 = arith.constant dense<0.000000e+00> : vector<8x128xf32>
    %54 = tpu.matmul %50, %3, %cst_29 {dimension_numbers = #tpu.dot_dimension_numbers<[1], [0], [0], [1], [0, 0, 1, 1], [], []>} : vector<8x128xf32>, vector<128x128xf32>, vector<8x128xf32> -> vector<8x128xf32>
    %55 = arith.addf %53, %54 : vector<8x128xf32>
    %56 = math.tanh %55 : vector<8x128xf32>
    %57 = arith.index_cast %c3_i32 : i32 to index
    %c0_30 = arith.constant 0 : index
    %c0_31 = arith.constant 0 : index
    %58 = vector.load %arg4[%57, %c0_30, %c0_31] : memref<8x8x128xf32, #tpu.memory_space<vmem>>, vector<1x8x128xf32>
    %59 = vector.shape_cast %58 : vector<1x8x128xf32> to vector<8x128xf32>
    %60 = vector.shape_cast %56 : vector<8x128xf32> to vector<1x8x128xf32>
    tpu.vector_store %arg4[%57, %c0_30, %c0_31], %60 {strides = array<i32>} : memref<8x8x128xf32, #tpu.memory_space<vmem>>, vector<1x8x128xf32>,
    %c4_i32 = arith.constant 4 : i32
    %61 = arith.index_cast %c4_i32 : i32 to index
    %c0_32 = arith.constant 0 : index
    %c0_33 = arith.constant 0 : index
    %62 = vector.load %arg2[%61, %c0_32, %c0_33] : memref<8x8x128xf32, #tpu.memory_space<vmem>>, vector<1x8x128xf32>
    %63 = vector.shape_cast %62 : vector<1x8x128xf32> to vector<8x128xf32>
    %64 = arith.addf %56, %63 : vector<8x128xf32>
    %65 = arith.index_cast %c4_i32 : i32 to index
    %c0_34 = arith.constant 0 : index
    %c0_35 = arith.constant 0 : index
    %66 = vector.load %arg1[%65, %c0_34, %c0_35] : memref<8x8x128xf32, #tpu.memory_space<vmem>>, vector<1x8x128xf32>
    %67 = vector.shape_cast %66 : vector<1x8x128xf32> to vector<8x128xf32>
    %cst_36 = arith.constant dense<0.000000e+00> : vector<8x128xf32>
    %68 = tpu.matmul %64, %3, %cst_36 {dimension_numbers = #tpu.dot_dimension_numbers<[1], [0], [0], [1], [0, 0, 1, 1], [], []>} : vector<8x128xf32>, vector<128x128xf32>, vector<8x128xf32> -> vector<8x128xf32>
    %69 = arith.addf %67, %68 : vector<8x128xf32>
    %70 = math.tanh %69 : vector<8x128xf32>
    %71 = arith.index_cast %c4_i32 : i32 to index
    %c0_37 = arith.constant 0 : index
    %c0_38 = arith.constant 0 : index
    %72 = vector.load %arg4[%71, %c0_37, %c0_38] : memref<8x8x128xf32, #tpu.memory_space<vmem>>, vector<1x8x128xf32>
    %73 = vector.shape_cast %72 : vector<1x8x128xf32> to vector<8x128xf32>
    %74 = vector.shape_cast %70 : vector<8x128xf32> to vector<1x8x128xf32>
    tpu.vector_store %arg4[%71, %c0_37, %c0_38], %74 {strides = array<i32>} : memref<8x8x128xf32, #tpu.memory_space<vmem>>, vector<1x8x128xf32>,
    %c5_i32 = arith.constant 5 : i32
    %75 = arith.index_cast %c5_i32 : i32 to index
    %c0_39 = arith.constant 0 : index
    %c0_40 = arith.constant 0 : index
    %76 = vector.load %arg2[%75, %c0_39, %c0_40] : memref<8x8x128xf32, #tpu.memory_space<vmem>>, vector<1x8x128xf32>
    %77 = vector.shape_cast %76 : vector<1x8x128xf32> to vector<8x128xf32>
    %78 = arith.addf %70, %77 : vector<8x128xf32>
    %79 = arith.index_cast %c5_i32 : i32 to index
    %c0_41 = arith.constant 0 : index
    %c0_42 = arith.constant 0 : index
    %80 = vector.load %arg1[%79, %c0_41, %c0_42] : memref<8x8x128xf32, #tpu.memory_space<vmem>>, vector<1x8x128xf32>
    %81 = vector.shape_cast %80 : vector<1x8x128xf32> to vector<8x128xf32>
    %cst_43 = arith.constant dense<0.000000e+00> : vector<8x128xf32>
    %82 = tpu.matmul %78, %3, %cst_43 {dimension_numbers = #tpu.dot_dimension_numbers<[1], [0], [0], [1], [0, 0, 1, 1], [], []>} : vector<8x128xf32>, vector<128x128xf32>, vector<8x128xf32> -> vector<8x128xf32>
    %83 = arith.addf %81, %82 : vector<8x128xf32>
    %84 = math.tanh %83 : vector<8x128xf32>
    %85 = arith.index_cast %c5_i32 : i32 to index
    %c0_44 = arith.constant 0 : index
    %c0_45 = arith.constant 0 : index
    %86 = vector.load %arg4[%85, %c0_44, %c0_45] : memref<8x8x128xf32, #tpu.memory_space<vmem>>, vector<1x8x128xf32>
    %87 = vector.shape_cast %86 : vector<1x8x128xf32> to vector<8x128xf32>
    %88 = vector.shape_cast %84 : vector<8x128xf32> to vector<1x8x128xf32>
    tpu.vector_store %arg4[%85, %c0_44, %c0_45], %88 {strides = array<i32>} : memref<8x8x128xf32, #tpu.memory_space<vmem>>, vector<1x8x128xf32>,
    %c6_i32 = arith.constant 6 : i32
    %89 = arith.index_cast %c6_i32 : i32 to index
    %c0_46 = arith.constant 0 : index
    %c0_47 = arith.constant 0 : index
    %90 = vector.load %arg2[%89, %c0_46, %c0_47] : memref<8x8x128xf32, #tpu.memory_space<vmem>>, vector<1x8x128xf32>
    %91 = vector.shape_cast %90 : vector<1x8x128xf32> to vector<8x128xf32>
    %92 = arith.addf %84, %91 : vector<8x128xf32>
    %93 = arith.index_cast %c6_i32 : i32 to index
    %c0_48 = arith.constant 0 : index
    %c0_49 = arith.constant 0 : index
    %94 = vector.load %arg1[%93, %c0_48, %c0_49] : memref<8x8x128xf32, #tpu.memory_space<vmem>>, vector<1x8x128xf32>
    %95 = vector.shape_cast %94 : vector<1x8x128xf32> to vector<8x128xf32>
    %cst_50 = arith.constant dense<0.000000e+00> : vector<8x128xf32>
    %96 = tpu.matmul %92, %3, %cst_50 {dimension_numbers = #tpu.dot_dimension_numbers<[1], [0], [0], [1], [0, 0, 1, 1], [], []>} : vector<8x128xf32>, vector<128x128xf32>, vector<8x128xf32> -> vector<8x128xf32>
    %97 = arith.addf %95, %96 : vector<8x128xf32>
    %98 = math.tanh %97 : vector<8x128xf32>
    %99 = arith.index_cast %c6_i32 : i32 to index
    %c0_51 = arith.constant 0 : index
    %c0_52 = arith.constant 0 : index
    %100 = vector.load %arg4[%99, %c0_51, %c0_52] : memref<8x8x128xf32, #tpu.memory_space<vmem>>, vector<1x8x128xf32>
    %101 = vector.shape_cast %100 : vector<1x8x128xf32> to vector<8x128xf32>
    %102 = vector.shape_cast %98 : vector<8x128xf32> to vector<1x8x128xf32>
    tpu.vector_store %arg4[%99, %c0_51, %c0_52], %102 {strides = array<i32>} : memref<8x8x128xf32, #tpu.memory_space<vmem>>, vector<1x8x128xf32>,
    %c7_i32 = arith.constant 7 : i32
    %103 = arith.index_cast %c7_i32 : i32 to index
    %c0_53 = arith.constant 0 : index
    %c0_54 = arith.constant 0 : index
    %104 = vector.load %arg2[%103, %c0_53, %c0_54] : memref<8x8x128xf32, #tpu.memory_space<vmem>>, vector<1x8x128xf32>
    %105 = vector.shape_cast %104 : vector<1x8x128xf32> to vector<8x128xf32>
    %106 = arith.addf %98, %105 : vector<8x128xf32>
    %107 = arith.index_cast %c7_i32 : i32 to index
    %c0_55 = arith.constant 0 : index
    %c0_56 = arith.constant 0 : index
    %108 = vector.load %arg1[%107, %c0_55, %c0_56] : memref<8x8x128xf32, #tpu.memory_space<vmem>>, vector<1x8x128xf32>
    %109 = vector.shape_cast %108 : vector<1x8x128xf32> to vector<8x128xf32>
    %cst_57 = arith.constant dense<0.000000e+00> : vector<8x128xf32>
    %110 = tpu.matmul %106, %3, %cst_57 {dimension_numbers = #tpu.dot_dimension_numbers<[1], [0], [0], [1], [0, 0, 1, 1], [], []>} : vector<8x128xf32>, vector<128x128xf32>, vector<8x128xf32> -> vector<8x128xf32>
    %111 = arith.addf %109, %110 : vector<8x128xf32>
    %112 = math.tanh %111 : vector<8x128xf32>
    %113 = arith.index_cast %c7_i32 : i32 to index
    %c0_58 = arith.constant 0 : index
    %c0_59 = arith.constant 0 : index
    %114 = vector.load %arg4[%113, %c0_58, %c0_59] : memref<8x8x128xf32, #tpu.memory_space<vmem>>, vector<1x8x128xf32>
    %115 = vector.shape_cast %114 : vector<1x8x128xf32> to vector<8x128xf32>
    %116 = vector.shape_cast %112 : vector<8x128xf32> to vector<1x8x128xf32>
    tpu.vector_store %arg4[%113, %c0_58, %c0_59], %116 {strides = array<i32>} : memref<8x8x128xf32, #tpu.memory_space<vmem>>, vector<1x8x128xf32>,
    %c8_i32 = arith.constant 8 : i32
    %c0_60 = arith.constant 0 : index
    %c0_61 = arith.constant 0 : index
    %117 = vector.load %arg6[%c0_60, %c0_61] : memref<8x128xf32, #tpu.memory_space<vmem>>, vector<8x128xf32>
    tpu.vector_store %arg6[%c0_60, %c0_61], %112 {strides = array<i32>} : memref<8x128xf32, #tpu.memory_space<vmem>>, vector<8x128xf32>,
    %c0_i32_62 = arith.constant 0 : i32
    %118 = arith.cmpi eq, %arg0, %c0_i32_62 : i32
    %119 = arith.extui %118 : i1 to i32
    %c0_i32_63 = arith.constant 0 : i32
    %120 = arith.cmpi ne, %119, %c0_i32_63 : i32
    scf.if %120 {
      %c0_64 = arith.constant 0 : index
      %c0_65 = arith.constant 0 : index
      %121 = vector.load %arg5[%c0_64, %c0_65] : memref<8x128xf32, #tpu.memory_space<vmem>>, vector<8x128xf32>
      tpu.vector_store %arg5[%c0_64, %c0_65], %112 {strides = array<i32>} : memref<8x128xf32, #tpu.memory_space<vmem>>, vector<8x128xf32>,
    } else {
    }
    return
  }
  func.func @transform_0(%arg0: i32) -> (i32, i32, i32) {
    %c0_i32 = arith.constant 0 : i32
    %c0_i32_0 = arith.constant 0 : i32
    %c0_i32_1 = arith.constant 0 : i32
    return %arg0, %c0_i32, %c0_i32_0 : i32, i32, i32
  }
  func.func @transform_1(%arg0: i32) -> (i32, i32, i32) {
    %c0_i32 = arith.constant 0 : i32
    %c0_i32_0 = arith.constant 0 : i32
    %c0_i32_1 = arith.constant 0 : i32
    return %arg0, %c0_i32, %c0_i32_0 : i32, i32, i32
  }
  func.func @transform_2(%arg0: i32) -> (i32, i32) {
    %c0_i32 = arith.constant 0 : i32
    %c0_i32_0 = arith.constant 0 : i32
    %c0_i32_1 = arith.constant 0 : i32
    return %c0_i32, %c0_i32_0 : i32, i32
  }
  func.func @transform_3(%arg0: i32) -> (i32, i32, i32) {
    %c0_i32 = arith.constant 0 : i32
    %c0_i32_0 = arith.constant 0 : i32
    %c0_i32_1 = arith.constant 0 : i32
    return %arg0, %c0_i32, %c0_i32_0 : i32, i32, i32
  }
  func.func @transform_4(%arg0: i32) -> (i32, i32) {
    %c0_i32 = arith.constant 0 : i32
    %c0_i32_0 = arith.constant 0 : i32
    %c0_i32_1 = arith.constant 0 : i32
    return %c0_i32, %c0_i32_0 : i32, i32
  }
}

</mosaic_0001>

<llo_original>
// kernel: tpu_custom_call.1
$region0: #{tpu_custom_call.1}
  #allocation0 [shape = 'u32[]', space=smem, size = 0x4, offset = 0x4, fixed_abs, tag = 'smem constant byte address 0x4 - core index']
  #allocation1 [shape = 'u32[144,128]{1,0:T(1,128)}', space=vmem, size = 0x12000, scoped, tag = 'internal scratch']
  #allocation2 [shape = 'f32[8,128]{1,0:T(8,128)}', space=vmem, size = 0x1000, scoped, tag = 'scratch operand']
  %s0 = inlined_call_operand.hbm [shape: f32[8,8,128], index: 0, kind: input, shape index: {}]
  %s1 = inlined_call_operand.hbm [shape: f32[8,8,128], index: 1, kind: input, shape index: {}]
  %s2 = inlined_call_operand.hbm [shape: f32[128,128], index: 2, kind: input, shape index: {}]
  %s3 = inlined_call_operand.hbm [shape: f32[8,8,128], index: 3, kind: output, shape index: {0}]
  %s4 = inlined_call_operand.hbm [shape: f32[8,128], index: 4, kind: output, shape index: {1}]
  %5 = xla_tuple %s3, %s4
  %s6 = sld [smem:[#allocation0]]
  $region50: #{tpu_custom_call.1} parent=0
    _
  %s8 = ssub.s32 1, %s6
  %s9 = scalar_select 0, %s8, %s6
  $region1: #{tpu_custom_call.1} parent=0
    #allocation3 [shape = 'u8[32768]{0}', space=vmem, size = 0x8000, scoped, tag = 'input window, operand 0, single buffered']
    #allocation4 [shape = 's32[1]{0}', space=sflag, size = 0x4, scoped, tag = 'scoped memory for tpu_custom_call.1']
    #allocation5 [shape = 's32[1]{0}', space=sflag, size = 0x4, scoped, tag = 'scoped memory for tpu_custom_call.1']
    #allocation6 [shape = 'u8[32768]{0}', space=vmem, size = 0x8000, scoped, tag = 'input window, operand 1, single buffered']
    #allocation7 [shape = 's32[1]{0}', space=sflag, size = 0x4, scoped, tag = 'scoped memory for tpu_custom_call.1']
    #allocation8 [shape = 'u8[65536]{0}', space=vmem, size = 0x10000, scoped, tag = 'input window, operand 2, single buffered']
    #allocation9 [shape = 'u8[32768]{0}', space=vmem, size = 0x8000, scoped, tag = 'output window, operand 0, single buffered']
    #allocation10 [shape = 'u8[4096]{0}', space=vmem, size = 0x1000, scoped, tag = 'output window, operand 1, single buffered']
    #allocation11 [shape = 's32[1]{0}', space=sflag, size = 0x4, scoped, tag = 'scoped memory for tpu_custom_call.1']
    %10 = vsyncpa [#allocation4], 0
    %11 = vsyncpa [#allocation7], 0
    %12 = vsyncpa [#allocation5], 0
    %13 = vsyncpa [#allocation11], 0
    // Predicated region
    $region2: #{tpu_custom_call.1} parent=1 // pred_check
      _
    $region3: #{tpu_custom_call.1} parent=1 // pred_check_branch
      %15 = sbr.rel (0) target = $region5
    $region4: #{tpu_custom_call.1} parent=1 // pred_region
      %s17 = ssub.s32 1024, 1024
      %18 = vsyncadd [#allocation4], %s17
      %s19 = sshll.u32 [#allocation3], 4
      %s20 = int_to_ptr.vmem [resolvable:$true] %s19
      %25 = dma.hbm_to_vmem [thread:$0]  %s0, 1024, %s20, [#allocation4], 128, 128, 8
    $region5: #{tpu_custom_call.1} parent=1 // pred_fallthru
      _
    // Predicated region
    $region6: #{tpu_custom_call.1} parent=1 // pred_check
      _
    $region7: #{tpu_custom_call.1} parent=1 // pred_check_branch
      %27 = sbr.rel (0) target = $region9
    $region8: #{tpu_custom_call.1} parent=1 // pred_region
      %s29 = ssub.s32 1024, 1024
      %30 = vsyncadd [#allocation7], %s29
      %s31 = sshll.u32 [#allocation6], 4
      %s32 = int_to_ptr.vmem [resolvable:$true] %s31
      %37 = dma.hbm_to_vmem [thread:$0]  %s1, 1024, %s32, [#allocation7], 128, 128, 8
    $region9: #{tpu_custom_call.1} parent=1 // pred_fallthru
      _
    // Predicated region
    $region10: #{tpu_custom_call.1} parent=1 // pred_check
      _
    $region11: #{tpu_custom_call.1} parent=1 // pred_check_branch
      %39 = sbr.rel (0) target = $region13
    $region12: #{tpu_custom_call.1} parent=1 // pred_region
      %s41 = ssub.s32 2048, 2048
      %42 = vsyncadd [#allocation7], %s41
      %s43 = sshll.u32 [#allocation8], 4
      %s44 = int_to_ptr.vmem [resolvable:$true] %s43
      %49 = dma.hbm_to_vmem [thread:$0]  %s2, 2048, %s44, [#allocation7], 128, 128, 8
    $region13: #{tpu_custom_call.1} parent=1 // pred_fallthru
      _
    // Predicated region
    $region14: #{tpu_custom_call.1} parent=1 // pred_check
      _
    $region15: #{tpu_custom_call.1} parent=1 // pred_check_branch
      %51 = sbr.rel (0) target = $region17
    $region16: #{tpu_custom_call.1} parent=1 // pred_region
      %52 = dma.done [#allocation4], 1024
    $region17: #{tpu_custom_call.1} parent=1 // pred_fallthru
      _
    // Predicated region
    $region18: #{tpu_custom_call.1} parent=1 // pred_check
      _
    $region19: #{tpu_custom_call.1} parent=1 // pred_check_branch
      %54 = sbr.rel (0) target = $region21
    $region20: #{tpu_custom_call.1} parent=1 // pred_region
      %55 = dma.done [#allocation7], 1024
    $region21: #{tpu_custom_call.1} parent=1 // pred_fallthru
      _
    // Predicated region
    $region22: #{tpu_custom_call.1} parent=1 // pred_check
      _
    $region23: #{tpu_custom_call.1} parent=1 // pred_check_branch
      %57 = sbr.rel (0) target = $region25
    $region24: #{tpu_custom_call.1} parent=1 // pred_region
      %58 = dma.done [#allocation7], 2048
    $region25: #{tpu_custom_call.1} parent=1 // pred_fallthru
      _
    %p59 = scmp.eq.s32.totalorder 0, 0
    // Predicated region
    $region26: #{tpu_custom_call.1} parent=1 // pred_check
      %p60 = pneg %p59
    $region27: #{tpu_custom_call.1} parent=1 // pred_check_branch
      %62 = sbr.rel (%p60) target = $region29
    $region28: #{tpu_custom_call.1} parent=1 // pred_region
      %63 = vst [vmem:[#allocation2] sm:$0xff] 0.0
    $region29: #{tpu_custom_call.1} parent=1 // pred_fallthru
      _
    %v64 = vld [vmem:[#allocation8] sm:$0xff]
    %v65 = vld [vmem:[#allocation8 + $0x8] sm:$0xff]
    %v66 = vld [vmem:[#allocation8 + $0x10] sm:$0xff]
    %v67 = vld [vmem:[#allocation8 + $0x18] sm:$0xff]
    %v68 = vld [vmem:[#allocation8 + $0x20] sm:$0xff]
    %v69 = vld [vmem:[#allocation8 + $0x28] sm:$0xff]
    %v70 = vld [vmem:[#allocation8 + $0x30] sm:$0xff]
    %v71 = vld [vmem:[#allocation8 + $0x38] sm:$0xff]
    %v72 = vld [vmem:[#allocation8 + $0x40] sm:$0xff]
    %v73 = vld [vmem:[#allocation8 + $0x48] sm:$0xff]
    %v74 = vld [vmem:[#allocation8 + $0x50] sm:$0xff]
    %v75 = vld [vmem:[#allocation8 + $0x58] sm:$0xff]
    %v76 = vld [vmem:[#allocation8 + $0x60] sm:$0xff]
    %v77 = vld [vmem:[#allocation8 + $0x68] sm:$0xff]
    %v78 = vld [vmem:[#allocation8 + $0x70] sm:$0xff]
    %v79 = vld [vmem:[#allocation8 + $0x78] sm:$0xff]
    %v80 = vld [vmem:[#allocation2] sm:$0xff]
    %v81 = vld [vmem:[#allocation6] sm:$0xff]
    %v82 = vadd.f32 %v80, %v81
    %v83 = vld [vmem:[#allocation3] sm:$0xff]
    %84 = vmatprep.subr.mxu0 0.0
    %85 = vmatpush1.msra.mxu0 %v64
    %86 = vmatprep.subr.mxu0 0.0
    %87 = vmatpush1.msra.mxu0 %v65
    %88 = vmatprep.subr.mxu0 0.0
    %89 = vmatpush1.msra.mxu0 %v66
    %90 = vmatprep.subr.mxu0 0.0
    %91 = vmatpush1.msra.mxu0 %v67
    %92 = vmatprep.subr.mxu0 0.0
    %93 = vmatpush1.msra.mxu0 %v68
    %94 = vmatprep.subr.mxu0 0.0
    %95 = vmatpush1.msra.mxu0 %v69
    %96 = vmatprep.subr.mxu0 0.0
    %97 = vmatpush1.msra.mxu0 %v70
    %98 = vmatprep.subr.mxu0 0.0
    %99 = vmatpush1.msra.mxu0 %v71
    %100 = vmatprep.subr.mxu0 0.0
    %101 = vmatpush1.msra.mxu0 %v72
    %102 = vmatprep.subr.mxu0 0.0
    %103 = vmatpush1.msra.mxu0 %v73
    %104 = vmatprep.subr.mxu0 0.0
    %105 = vmatpush1.msra.mxu0 %v74
    %106 = vmatprep.subr.mxu0 0.0
    %107 = vmatpush1.msra.mxu0 %v75
    %108 = vmatprep.subr.mxu0 0.0
    %109 = vmatpush1.msra.mxu0 %v76
    %110 = vmatprep.subr.mxu0 0.0
    %111 = vmatpush1.msra.mxu0 %v77
    %112 = vmatprep.subr.mxu0 0.0
    %113 = vmatpush1.msra.mxu0 %v78
    %114 = vmatprep.subr.mxu0 0.0
    %115 = vmatpush1.msra.mxu0 %v79
    %116 = vmatprep.subr.mxu0 0.0
    %117 = vmatpush1.msra.mxu0 0.0
    %118 = vmatprep.subr.mxu0 0.0
    %119 = vmatpush1.msra.mxu0 0.0
    %120 = vmatprep.subr.mxu0 0.0
    %121 = vmatpush1.msra.mxu0 0.0
    %122 = vmatprep.subr.mxu0 0.0
    %123 = vmatpush1.msra.mxu0 0.0
    %124 = vmatprep.subr.mxu0 0.0
    %125 = vmatpush1.msra.mxu0 0.0
    %126 = vmatprep.subr.mxu0 0.0
    %127 = vmatpush1.msra.mxu0 0.0
    %128 = vmatprep.subr.mxu0 0.0
    %129 = vmatpush1.msra.mxu0 0.0
    %130 = vmatprep.subr.mxu0 0.0
    %131 = vmatpush1.msra.mxu0 0.0
    %132 = vmatprep.subr.mxu0 0.0
    %133 = vmatpush1.msra.mxu0 0.0
    %134 = vmatprep.subr.mxu0 0.0
    %135 = vmatpush1.msra.mxu0 0.0
    %136 = vmatprep.subr.mxu0 0.0
    %137 = vmatpush1.msra.mxu0 0.0
    %138 = vmatprep.subr.mxu0 0.0
    %139 = vmatpush1.msra.mxu0 0.0
    %140 = vmatprep.subr.mxu0 0.0
    %141 = vmatpush1.msra.mxu0 0.0
    %142 = vmatprep.subr.mxu0 0.0
    %143 = vmatpush1.msra.mxu0 0.0
    %144 = vmatprep.subr.mxu0 0.0
    %145 = vmatpush1.msra.mxu0 0.0
    %146 = vmatprep.subr.mxu0 0.0
    %147 = vmatpush1.msra.mxu0 0.0
    %148 = vmatprep.mubr.f32.mxu0 0.0
    %149 = vmatmul.mubr.f32.gmra.mrb[0].mxu0 %v82
    %v150 = vpop.f32.mrb[0].mxu0
    %v151 = vadd.f32 0.0, %v150
    %v152 = vpop.f32.mrb[0].mxu0
    %153 = vdwg.mxu0
    %v154 = vadd.f32 %v83, %v151
    %v155 = vtanh.pop %v154
    %156 = vst [vmem:[#allocation9] sm:$0xff] %v155
    %s157 = scalar_lea.vmem [#allocation6], 8
    %v158 = vld [vmem:[%s157] sm:$0xff]
    %v159 = vadd.f32 %v155, %v158
    %s160 = scalar_lea.vmem [#allocation3], 8
    %v161 = vld [vmem:[%s160] sm:$0xff]
    %162 = vmatprep.subr.mxu0 0.0
    %163 = vmatpush1.msra.mxu0 %v64
    %164 = vmatprep.subr.mxu0 0.0
    %165 = vmatpush1.msra.mxu0 %v65
    %166 = vmatprep.subr.mxu0 0.0
    %167 = vmatpush1.msra.mxu0 %v66
    %168 = vmatprep.subr.mxu0 0.0
    %169 = vmatpush1.msra.mxu0 %v67
    %170 = vmatprep.subr.mxu0 0.0
    %171 = vmatpush1.msra.mxu0 %v68
    %172 = vmatprep.subr.mxu0 0.0
    %173 = vmatpush1.msra.mxu0 %v69
    %174 = vmatprep.subr.mxu0 0.0
    %175 = vmatpush1.msra.mxu0 %v70
    %176 = vmatprep.subr.mxu0 0.0
    %177 = vmatpush1.msra.mxu0 %v71
    %178 = vmatprep.subr.mxu0 0.0
    %179 = vmatpush1.msra.mxu0 %v72
    %180 = vmatprep.subr.mxu0 0.0
    %181 = vmatpush1.msra.mxu0 %v73
    %182 = vmatprep.subr.mxu0 0.0
    %183 = vmatpush1.msra.mxu0 %v74
    %184 = vmatprep.subr.mxu0 0.0
    %185 = vmatpush1.msra.mxu0 %v75
    %186 = vmatprep.subr.mxu0 0.0
    %187 = vmatpush1.msra.mxu0 %v76
    %188 = vmatprep.subr.mxu0 0.0
    %189 = vmatpush1.msra.mxu0 %v77
    %190 = vmatprep.subr.mxu0 0.0
    %191 = vmatpush1.msra.mxu0 %v78
    %192 = vmatprep.subr.mxu0 0.0
    %193 = vmatpush1.msra.mxu0 %v79
    %194 = vmatprep.subr.mxu0 0.0
    %195 = vmatpush1.msra.mxu0 0.0
    %196 = vmatprep.subr.mxu0 0.0
    %197 = vmatpush1.msra.mxu0 0.0
    %198 = vmatprep.subr.mxu0 0.0
    %199 = vmatpush1.msra.mxu0 0.0
    %200 = vmatprep.subr.mxu0 0.0
    %201 = vmatpush1.msra.mxu0 0.0
    %202 = vmatprep.subr.mxu0 0.0
    %203 = vmatpush1.msra.mxu0 0.0
    %204 = vmatprep.subr.mxu0 0.0
    %205 = vmatpush1.msra.mxu0 0.0
    %206 = vmatprep.subr.mxu0 0.0
    %207 = vmatpush1.msra.mxu0 0.0
    %208 = vmatprep.subr.mxu0 0.0
    %209 = vmatpush1.msra.mxu0 0.0
    %210 = vmatprep.subr.mxu0 0.0
    %211 = vmatpush1.msra.mxu0 0.0
    %212 = vmatprep.subr.mxu0 0.0
    %213 = vmatpush1.msra.mxu0 0.0
    %214 = vmatprep.subr.mxu0 0.0
    %215 = vmatpush1.msra.mxu0 0.0
    %216 = vmatprep.subr.mxu0 0.0
    %217 = vmatpush1.msra.mxu0 0.0
    %218 = vmatprep.subr.mxu0 0.0
    %219 = vmatpush1.msra.mxu0 0.0
    %220 = vmatprep.subr.mxu0 0.0
    %221 = vmatpush1.msra.mxu0 0.0
    %222 = vmatprep.subr.mxu0 0.0
    %223 = vmatpush1.msra.mxu0 0.0
    %224 = vmatprep.subr.mxu0 0.0
    %225 = vmatpush1.msra.mxu0 0.0
    %226 = vmatprep.mubr.f32.mxu0 0.0
    %227 = vmatmul.mubr.f32.gmra.mrb[0].mxu0 %v159
    %v228 = vpop.f32.mrb[0].mxu0
    %v229 = vadd.f32 0.0, %v228
    %v230 = vpop.f32.mrb[0].mxu0
    %231 = vdwg.mxu0
    %v232 = vadd.f32 %v161, %v229
    %v233 = vtanh.pop %v232
    %s234 = scalar_lea.vmem [#allocation9], 8
    %235 = vst [vmem:[%s234] sm:$0xff] %v233
    %s236 = scalar_lea.vmem [#allocation6], 16
    %v237 = vld [vmem:[%s236] sm:$0xff]
    %v238 = vadd.f32 %v233, %v237
    %s239 = scalar_lea.vmem [#allocation3], 16
    %v240 = vld [vmem:[%s239] sm:$0xff]
    %241 = vmatprep.subr.mxu0 0.0
    %242 = vmatpush1.msra.mxu0 %v64
    %243 = vmatprep.subr.mxu0 0.0
    %244 = vmatpush1.msra.mxu0 %v65
    %245 = vmatprep.subr.mxu0 0.0
    %246 = vmatpush1.msra.mxu0 %v66
    %247 = vmatprep.subr.mxu0 0.0
    %248 = vmatpush1.msra.mxu0 %v67
    %249 = vmatprep.subr.mxu0 0.0
    %250 = vmatpush1.msra.mxu0 %v68
    %251 = vmatprep.subr.mxu0 0.0
    %252 = vmatpush1.msra.mxu0 %v69
    %253 = vmatprep.subr.mxu0 0.0
    %254 = vmatpush1.msra.mxu0 %v70
    %255 = vmatprep.subr.mxu0 0.0
    %256 = vmatpush1.msra.mxu0 %v71
    %257 = vmatprep.subr.mxu0 0.0
    %258 = vmatpush1.msra.mxu0 %v72
    %259 = vmatprep.subr.mxu0 0.0
    %260 = vmatpush1.msra.mxu0 %v73
    %261 = vmatprep.subr.mxu0 0.0
    %262 = vmatpush1.msra.mxu0 %v74
    %263 = vmatprep.subr.mxu0 0.0
    %264 = vmatpush1.msra.mxu0 %v75
    %265 = vmatprep.subr.mxu0 0.0
    %266 = vmatpush1.msra.mxu0 %v76
    %267 = vmatprep.subr.mxu0 0.0
    %268 = vmatpush1.msra.mxu0 %v77
    %269 = vmatprep.subr.mxu0 0.0
    %270 = vmatpush1.msra.mxu0 %v78
    %271 = vmatprep.subr.mxu0 0.0
    %272 = vmatpush1.msra.mxu0 %v79
    %273 = vmatprep.subr.mxu0 0.0
    %274 = vmatpush1.msra.mxu0 0.0
    %275 = vmatprep.subr.mxu0 0.0
    %276 = vmatpush1.msra.mxu0 0.0
    %277 = vmatprep.subr.mxu0 0.0
    %278 = vmatpush1.msra.mxu0 0.0
    %279 = vmatprep.subr.mxu0 0.0
    %280 = vmatpush1.msra.mxu0 0.0
    %281 = vmatprep.subr.mxu0 0.0
    %282 = vmatpush1.msra.mxu0 0.0
    %283 = vmatprep.subr.mxu0 0.0
    %284 = vmatpush1.msra.mxu0 0.0
    %285 = vmatprep.subr.mxu0 0.0
    %286 = vmatpush1.msra.mxu0 0.0
    %287 = vmatprep.subr.mxu0 0.0
    %288 = vmatpush1.msra.mxu0 0.0
    %289 = vmatprep.subr.mxu0 0.0
    %290 = vmatpush1.msra.mxu0 0.0
    %291 = vmatprep.subr.mxu0 0.0
    %292 = vmatpush1.msra.mxu0 0.0
    %293 = vmatprep.subr.mxu0 0.0
    %294 = vmatpush1.msra.mxu0 0.0
    %295 = vmatprep.subr.mxu0 0.0
    %296 = vmatpush1.msra.mxu0 0.0
    %297 = vmatprep.subr.mxu0 0.0
    %298 = vmatpush1.msra.mxu0 0.0
    %299 = vmatprep.subr.mxu0 0.0
    %300 = vmatpush1.msra.mxu0 0.0
    %301 = vmatprep.subr.mxu0 0.0
    %302 = vmatpush1.msra.mxu0 0.0
    %303 = vmatprep.subr.mxu0 0.0
    %304 = vmatpush1.msra.mxu0 0.0
    %305 = vmatprep.mubr.f32.mxu0 0.0
    %306 = vmatmul.mubr.f32.gmra.mrb[0].mxu0 %v238
    %v307 = vpop.f32.mrb[0].mxu0
    %v308 = vadd.f32 0.0, %v307
    %v309 = vpop.f32.mrb[0].mxu0
    %310 = vdwg.mxu0
    %v311 = vadd.f32 %v240, %v308
    %v312 = vtanh.pop %v311
    %s313 = scalar_lea.vmem [#allocation9], 16
    %314 = vst [vmem:[%s313] sm:$0xff] %v312
    %s315 = scalar_lea.vmem [#allocation6], 24
    %v316 = vld [vmem:[%s315] sm:$0xff]
    %v317 = vadd.f32 %v312, %v316
    %s318 = scalar_lea.vmem [#allocation3], 24
    %v319 = vld [vmem:[%s318] sm:$0xff]
    %320 = vmatprep.subr.mxu0 0.0
    %321 = vmatpush1.msra.mxu0 %v64
    %322 = vmatprep.subr.mxu0 0.0
    %323 = vmatpush1.msra.mxu0 %v65
    %324 = vmatprep.subr.mxu0 0.0
    %325 = vmatpush1.msra.mxu0 %v66
    %326 = vmatprep.subr.mxu0 0.0
    %327 = vmatpush1.msra.mxu0 %v67
    %328 = vmatprep.subr.mxu0 0.0
    %329 = vmatpush1.msra.mxu0 %v68
    %330 = vmatprep.subr.mxu0 0.0
    %331 = vmatpush1.msra.mxu0 %v69
    %332 = vmatprep.subr.mxu0 0.0
    %333 = vmatpush1.msra.mxu0 %v70
    %334 = vmatprep.subr.mxu0 0.0
    %335 = vmatpush1.msra.mxu0 %v71
    %336 = vmatprep.subr.mxu0 0.0
    %337 = vmatpush1.msra.mxu0 %v72
    %338 = vmatprep.subr.mxu0 0.0
    %339 = vmatpush1.msra.mxu0 %v73
    %340 = vmatprep.subr.mxu0 0.0
    %341 = vmatpush1.msra.mxu0 %v74
    %342 = vmatprep.subr.mxu0 0.0
    %343 = vmatpush1.msra.mxu0 %v75
    %344 = vmatprep.subr.mxu0 0.0
    %345 = vmatpush1.msra.mxu0 %v76
    %346 = vmatprep.subr.mxu0 0.0
    %347 = vmatpush1.msra.mxu0 %v77
    %348 = vmatprep.subr.mxu0 0.0
    %349 = vmatpush1.msra.mxu0 %v78
    %350 = vmatprep.subr.mxu0 0.0
    %351 = vmatpush1.msra.mxu0 %v79
    %352 = vmatprep.subr.mxu0 0.0
    %353 = vmatpush1.msra.mxu0 0.0
    %354 = vmatprep.subr.mxu0 0.0
    %355 = vmatpush1.msra.mxu0 0.0
    %356 = vmatprep.subr.mxu0 0.0
    %357 = vmatpush1.msra.mxu0 0.0
    %358 = vmatprep.subr.mxu0 0.0
    %359 = vmatpush1.msra.mxu0 0.0
    %360 = vmatprep.subr.mxu0 0.0
    %361 = vmatpush1.msra.mxu0 0.0
    %362 = vmatprep.subr.mxu0 0.0
    %363 = vmatpush1.msra.mxu0 0.0
    %364 = vmatprep.subr.mxu0 0.0
    %365 = vmatpush1.msra.mxu0 0.0
    %366 = vmatprep.subr.mxu0 0.0
    %367 = vmatpush1.msra.mxu0 0.0
    %368 = vmatprep.subr.mxu0 0.0
    %369 = vmatpush1.msra.mxu0 0.0
    %370 = vmatprep.subr.mxu0 0.0
    %371 = vmatpush1.msra.mxu0 0.0
    %372 = vmatprep.subr.mxu0 0.0
    %373 = vmatpush1.msra.mxu0 0.0
    %374 = vmatprep.subr.mxu0 0.0
    %375 = vmatpush1.msra.mxu0 0.0
    %376 = vmatprep.subr.mxu0 0.0
    %377 = vmatpush1.msra.mxu0 0.0
    %378 = vmatprep.subr.mxu0 0.0
    %379 = vmatpush1.msra.mxu0 0.0
    %380 = vmatprep.subr.mxu0 0.0
    %381 = vmatpush1.msra.mxu0 0.0
    %382 = vmatprep.subr.mxu0 0.0
    %383 = vmatpush1.msra.mxu0 0.0
    %384 = vmatprep.mubr.f32.mxu0 0.0
    %385 = vmatmul.mubr.f32.gmra.mrb[0].mxu0 %v317
    %v386 = vpop.f32.mrb[0].mxu0
    %v387 = vadd.f32 0.0, %v386
    %v388 = vpop.f32.mrb[0].mxu0
    %389 = vdwg.mxu0
    %v390 = vadd.f32 %v319, %v387
    %v391 = vtanh.pop %v390
    %s392 = scalar_lea.vmem [#allocation9], 24
    %393 = vst [vmem:[%s392] sm:$0xff] %v391
    %s394 = scalar_lea.vmem [#allocation6], 32
    %v395 = vld [vmem:[%s394] sm:$0xff]
    %v396 = vadd.f32 %v391, %v395
    %s397 = scalar_lea.vmem [#allocation3], 32
    %v398 = vld [vmem:[%s397] sm:$0xff]
    %399 = vmatprep.subr.mxu0 0.0
    %400 = vmatpush1.msra.mxu0 %v64
    %401 = vmatprep.subr.mxu0 0.0
    %402 = vmatpush1.msra.mxu0 %v65
    %403 = vmatprep.subr.mxu0 0.0
    %404 = vmatpush1.msra.mxu0 %v66
    %405 = vmatprep.subr.mxu0 0.0
    %406 = vmatpush1.msra.mxu0 %v67
    %407 = vmatprep.subr.mxu0 0.0
    %408 = vmatpush1.msra.mxu0 %v68
    %409 = vmatprep.subr.mxu0 0.0
    %410 = vmatpush1.msra.mxu0 %v69
    %411 = vmatprep.subr.mxu0 0.0
    %412 = vmatpush1.msra.mxu0 %v70
    %413 = vmatprep.subr.mxu0 0.0
    %414 = vmatpush1.msra.mxu0 %v71
    %415 = vmatprep.subr.mxu0 0.0
    %416 = vmatpush1.msra.mxu0 %v72
    %417 = vmatprep.subr.mxu0 0.0
    %418 = vmatpush1.msra.mxu0 %v73
    %419 = vmatprep.subr.mxu0 0.0
    %420 = vmatpush1.msra.mxu0 %v74
    %421 = vmatprep.subr.mxu0 0.0
    %422 = vmatpush1.msra.mxu0 %v75
    %423 = vmatprep.subr.mxu0 0.0
    %424 = vmatpush1.msra.mxu0 %v76
    %425 = vmatprep.subr.mxu0 0.0
    %426 = vmatpush1.msra.mxu0 %v77
    %427 = vmatprep.subr.mxu0 0.0
    %428 = vmatpush1.msra.mxu0 %v78
    %429 = vmatprep.subr.mxu0 0.0
    %430 = vmatpush1.msra.mxu0 %v79
    %431 = vmatprep.subr.mxu0 0.0
    %432 = vmatpush1.msra.mxu0 0.0
    %433 = vmatprep.subr.mxu0 0.0
    %434 = vmatpush1.msra.mxu0 0.0
    %435 = vmatprep.subr.mxu0 0.0
    %436 = vmatpush1.msra.mxu0 0.0
    %437 = vmatprep.subr.mxu0 0.0
    %438 = vmatpush1.msra.mxu0 0.0
    %439 = vmatprep.subr.mxu0 0.0
    %440 = vmatpush1.msra.mxu0 0.0
    %441 = vmatprep.subr.mxu0 0.0
    %442 = vmatpush1.msra.mxu0 0.0
    %443 = vmatprep.subr.mxu0 0.0
    %444 = vmatpush1.msra.mxu0 0.0
    %445 = vmatprep.subr.mxu0 0.0
    %446 = vmatpush1.msra.mxu0 0.0
    %447 = vmatprep.subr.mxu0 0.0
    %448 = vmatpush1.msra.mxu0 0.0
    %449 = vmatprep.subr.mxu0 0.0
    %450 = vmatpush1.msra.mxu0 0.0
    %451 = vmatprep.subr.mxu0 0.0
    %452 = vmatpush1.msra.mxu0 0.0
    %453 = vmatprep.subr.mxu0 0.0
    %454 = vmatpush1.msra.mxu0 0.0
    %455 = vmatprep.subr.mxu0 0.0
    %456 = vmatpush1.msra.mxu0 0.0
    %457 = vmatprep.subr.mxu0 0.0
    %458 = vmatpush1.msra.mxu0 0.0
    %459 = vmatprep.subr.mxu0 0.0
    %460 = vmatpush1.msra.mxu0 0.0
    %461 = vmatprep.subr.mxu0 0.0
    %462 = vmatpush1.msra.mxu0 0.0
    %463 = vmatprep.mubr.f32.mxu0 0.0
    %464 = vmatmul.mubr.f32.gmra.mrb[0].mxu0 %v396
    %v465 = vpop.f32.mrb[0].mxu0
    %v466 = vadd.f32 0.0, %v465
    %v467 = vpop.f32.mrb[0].mxu0
    %468 = vdwg.mxu0
    %v469 = vadd.f32 %v398, %v466
    %v470 = vtanh.pop %v469
    %s471 = scalar_lea.vmem [#allocation9], 32
    %472 = vst [vmem:[%s471] sm:$0xff] %v470
    %s473 = scalar_lea.vmem [#allocation6], 40
    %v474 = vld [vmem:[%s473] sm:$0xff]
    %v475 = vadd.f32 %v470, %v474
    %s476 = scalar_lea.vmem [#allocation3], 40
    %v477 = vld [vmem:[%s476] sm:$0xff]
    %478 = vmatprep.subr.mxu0 0.0
    %479 = vmatpush1.msra.mxu0 %v64
    %480 = vmatprep.subr.mxu0 0.0
    %481 = vmatpush1.msra.mxu0 %v65
    %482 = vmatprep.subr.mxu0 0.0
    %483 = vmatpush1.msra.mxu0 %v66
    %484 = vmatprep.subr.mxu0 0.0
    %485 = vmatpush1.msra.mxu0 %v67
    %486 = vmatprep.subr.mxu0 0.0
    %487 = vmatpush1.msra.mxu0 %v68
    %488 = vmatprep.subr.mxu0 0.0
    %489 = vmatpush1.msra.mxu0 %v69
    %490 = vmatprep.subr.mxu0 0.0
    %491 = vmatpush1.msra.mxu0 %v70
    %492 = vmatprep.subr.mxu0 0.0
    %493 = vmatpush1.msra.mxu0 %v71
    %494 = vmatprep.subr.mxu0 0.0
    %495 = vmatpush1.msra.mxu0 %v72
    %496 = vmatprep.subr.mxu0 0.0
    %497 = vmatpush1.msra.mxu0 %v73
    %498 = vmatprep.subr.mxu0 0.0
    %499 = vmatpush1.msra.mxu0 %v74
    %500 = vmatprep.subr.mxu0 0.0
    %501 = vmatpush1.msra.mxu0 %v75
    %502 = vmatprep.subr.mxu0 0.0
    %503 = vmatpush1.msra.mxu0 %v76
    %504 = vmatprep.subr.mxu0 0.0
    %505 = vmatpush1.msra.mxu0 %v77
    %506 = vmatprep.subr.mxu0 0.0
    %507 = vmatpush1.msra.mxu0 %v78
    %508 = vmatprep.subr.mxu0 0.0
    %509 = vmatpush1.msra.mxu0 %v79
    %510 = vmatprep.subr.mxu0 0.0
    %511 = vmatpush1.msra.mxu0 0.0
    %512 = vmatprep.subr.mxu0 0.0
    %513 = vmatpush1.msra.mxu0 0.0
    %514 = vmatprep.subr.mxu0 0.0
    %515 = vmatpush1.msra.mxu0 0.0
    %516 = vmatprep.subr.mxu0 0.0
    %517 = vmatpush1.msra.mxu0 0.0
    %518 = vmatprep.subr.mxu0 0.0
    %519 = vmatpush1.msra.mxu0 0.0
    %520 = vmatprep.subr.mxu0 0.0
    %521 = vmatpush1.msra.mxu0 0.0
    %522 = vmatprep.subr.mxu0 0.0
    %523 = vmatpush1.msra.mxu0 0.0
    %524 = vmatprep.subr.mxu0 0.0
    %525 = vmatpush1.msra.mxu0 0.0
    %526 = vmatprep.subr.mxu0 0.0
    %527 = vmatpush1.msra.mxu0 0.0
    %528 = vmatprep.subr.mxu0 0.0
    %529 = vmatpush1.msra.mxu0 0.0
    %530 = vmatprep.subr.mxu0 0.0
    %531 = vmatpush1.msra.mxu0 0.0
    %532 = vmatprep.subr.mxu0 0.0
    %533 = vmatpush1.msra.mxu0 0.0
    %534 = vmatprep.subr.mxu0 0.0
    %535 = vmatpush1.msra.mxu0 0.0
    %536 = vmatprep.subr.mxu0 0.0
    %537 = vmatpush1.msra.mxu0 0.0
    %538 = vmatprep.subr.mxu0 0.0
    %539 = vmatpush1.msra.mxu0 0.0
    %540 = vmatprep.subr.mxu0 0.0
    %541 = vmatpush1.msra.mxu0 0.0
    %542 = vmatprep.mubr.f32.mxu0 0.0
    %543 = vmatmul.mubr.f32.gmra.mrb[0].mxu0 %v475
    %v544 = vpop.f32.mrb[0].mxu0
    %v545 = vadd.f32 0.0, %v544
    %v546 = vpop.f32.mrb[0].mxu0
    %547 = vdwg.mxu0
    %v548 = vadd.f32 %v477, %v545
    %v549 = vtanh.pop %v548
    %s550 = scalar_lea.vmem [#allocation9], 40
    %551 = vst [vmem:[%s550] sm:$0xff] %v549
    %s552 = scalar_lea.vmem [#allocation6], 48
    %v553 = vld [vmem:[%s552] sm:$0xff]
    %v554 = vadd.f32 %v549, %v553
    %s555 = scalar_lea.vmem [#allocation3], 48
    %v556 = vld [vmem:[%s555] sm:$0xff]
    %557 = vmatprep.subr.mxu0 0.0
    %558 = vmatpush1.msra.mxu0 %v64
    %559 = vmatprep.subr.mxu0 0.0
    %560 = vmatpush1.msra.mxu0 %v65
    %561 = vmatprep.subr.mxu0 0.0
    %562 = vmatpush1.msra.mxu0 %v66
    %563 = vmatprep.subr.mxu0 0.0
    %564 = vmatpush1.msra.mxu0 %v67
    %565 = vmatprep.subr.mxu0 0.0
    %566 = vmatpush1.msra.mxu0 %v68
    %567 = vmatprep.subr.mxu0 0.0
    %568 = vmatpush1.msra.mxu0 %v69
    %569 = vmatprep.subr.mxu0 0.0
    %570 = vmatpush1.msra.mxu0 %v70
    %571 = vmatprep.subr.mxu0 0.0
    %572 = vmatpush1.msra.mxu0 %v71
    %573 = vmatprep.subr.mxu0 0.0
    %574 = vmatpush1.msra.mxu0 %v72
    %575 = vmatprep.subr.mxu0 0.0
    %576 = vmatpush1.msra.mxu0 %v73
    %577 = vmatprep.subr.mxu0 0.0
    %578 = vmatpush1.msra.mxu0 %v74
    %579 = vmatprep.subr.mxu0 0.0
    %580 = vmatpush1.msra.mxu0 %v75
    %581 = vmatprep.subr.mxu0 0.0
    %582 = vmatpush1.msra.mxu0 %v76
    %583 = vmatprep.subr.mxu0 0.0
    %584 = vmatpush1.msra.mxu0 %v77
    %585 = vmatprep.subr.mxu0 0.0
    %586 = vmatpush1.msra.mxu0 %v78
    %587 = vmatprep.subr.mxu0 0.0
    %588 = vmatpush1.msra.mxu0 %v79
    %589 = vmatprep.subr.mxu0 0.0
    %590 = vmatpush1.msra.mxu0 0.0
    %591 = vmatprep.subr.mxu0 0.0
    %592 = vmatpush1.msra.mxu0 0.0
    %593 = vmatprep.subr.mxu0 0.0
    %594 = vmatpush1.msra.mxu0 0.0
    %595 = vmatprep.subr.mxu0 0.0
    %596 = vmatpush1.msra.mxu0 0.0
    %597 = vmatprep.subr.mxu0 0.0
    %598 = vmatpush1.msra.mxu0 0.0
    %599 = vmatprep.subr.mxu0 0.0
    %600 = vmatpush1.msra.mxu0 0.0
    %601 = vmatprep.subr.mxu0 0.0
    %602 = vmatpush1.msra.mxu0 0.0
    %603 = vmatprep.subr.mxu0 0.0
    %604 = vmatpush1.msra.mxu0 0.0
    %605 = vmatprep.subr.mxu0 0.0
    %606 = vmatpush1.msra.mxu0 0.0
    %607 = vmatprep.subr.mxu0 0.0
    %608 = vmatpush1.msra.mxu0 0.0
    %609 = vmatprep.subr.mxu0 0.0
    %610 = vmatpush1.msra.mxu0 0.0
    %611 = vmatprep.subr.mxu0 0.0
    %612 = vmatpush1.msra.mxu0 0.0
    %613 = vmatprep.subr.mxu0 0.0
    %614 = vmatpush1.msra.mxu0 0.0
    %615 = vmatprep.subr.mxu0 0.0
    %616 = vmatpush1.msra.mxu0 0.0
    %617 = vmatprep.subr.mxu0 0.0
    %618 = vmatpush1.msra.mxu0 0.0
    %619 = vmatprep.subr.mxu0 0.0
    %620 = vmatpush1.msra.mxu0 0.0
    %621 = vmatprep.mubr.f32.mxu0 0.0
    %622 = vmatmul.mubr.f32.gmra.mrb[0].mxu0 %v554
    %v623 = vpop.f32.mrb[0].mxu0
    %v624 = vadd.f32 0.0, %v623
    %v625 = vpop.f32.mrb[0].mxu0
    %626 = vdwg.mxu0
    %v627 = vadd.f32 %v556, %v624
    %v628 = vtanh.pop %v627
    %s629 = scalar_lea.vmem [#allocation9], 48
    %630 = vst [vmem:[%s629] sm:$0xff] %v628
    %s631 = scalar_lea.vmem [#allocation6], 56
    %v632 = vld [vmem:[%s631] sm:$0xff]
    %v633 = vadd.f32 %v628, %v632
    %s634 = scalar_lea.vmem [#allocation3], 56
    %v635 = vld [vmem:[%s634] sm:$0xff]
    %636 = vmatprep.subr.mxu0 0.0
    %637 = vmatpush1.msra.mxu0 %v64
    %638 = vmatprep.subr.mxu0 0.0
    %639 = vmatpush1.msra.mxu0 %v65
    %640 = vmatprep.subr.mxu0 0.0
    %641 = vmatpush1.msra.mxu0 %v66
    %642 = vmatprep.subr.mxu0 0.0
    %643 = vmatpush1.msra.mxu0 %v67
    %644 = vmatprep.subr.mxu0 0.0
    %645 = vmatpush1.msra.mxu0 %v68
    %646 = vmatprep.subr.mxu0 0.0
    %647 = vmatpush1.msra.mxu0 %v69
    %648 = vmatprep.subr.mxu0 0.0
    %649 = vmatpush1.msra.mxu0 %v70
    %650 = vmatprep.subr.mxu0 0.0
    %651 = vmatpush1.msra.mxu0 %v71
    %652 = vmatprep.subr.mxu0 0.0
    %653 = vmatpush1.msra.mxu0 %v72
    %654 = vmatprep.subr.mxu0 0.0
    %655 = vmatpush1.msra.mxu0 %v73
    %656 = vmatprep.subr.mxu0 0.0
    %657 = vmatpush1.msra.mxu0 %v74
    %658 = vmatprep.subr.mxu0 0.0
    %659 = vmatpush1.msra.mxu0 %v75
    %660 = vmatprep.subr.mxu0 0.0
    %661 = vmatpush1.msra.mxu0 %v76
    %662 = vmatprep.subr.mxu0 0.0
    %663 = vmatpush1.msra.mxu0 %v77
    %664 = vmatprep.subr.mxu0 0.0
    %665 = vmatpush1.msra.mxu0 %v78
    %666 = vmatprep.subr.mxu0 0.0
    %667 = vmatpush1.msra.mxu0 %v79
    %668 = vmatprep.subr.mxu0 0.0
    %669 = vmatpush1.msra.mxu0 0.0
    %670 = vmatprep.subr.mxu0 0.0
    %671 = vmatpush1.msra.mxu0 0.0
    %672 = vmatprep.subr.mxu0 0.0
    %673 = vmatpush1.msra.mxu0 0.0
    %674 = vmatprep.subr.mxu0 0.0
    %675 = vmatpush1.msra.mxu0 0.0
    %676 = vmatprep.subr.mxu0 0.0
    %677 = vmatpush1.msra.mxu0 0.0
    %678 = vmatprep.subr.mxu0 0.0
    %679 = vmatpush1.msra.mxu0 0.0
    %680 = vmatprep.subr.mxu0 0.0
    %681 = vmatpush1.msra.mxu0 0.0
    %682 = vmatprep.subr.mxu0 0.0
    %683 = vmatpush1.msra.mxu0 0.0
    %684 = vmatprep.subr.mxu0 0.0
    %685 = vmatpush1.msra.mxu0 0.0
    %686 = vmatprep.subr.mxu0 0.0
    %687 = vmatpush1.msra.mxu0 0.0
    %688 = vmatprep.subr.mxu0 0.0
    %689 = vmatpush1.msra.mxu0 0.0
    %690 = vmatprep.subr.mxu0 0.0
    %691 = vmatpush1.msra.mxu0 0.0
    %692 = vmatprep.subr.mxu0 0.0
    %693 = vmatpush1.msra.mxu0 0.0
    %694 = vmatprep.subr.mxu0 0.0
    %695 = vmatpush1.msra.mxu0 0.0
    %696 = vmatprep.subr.mxu0 0.0
    %697 = vmatpush1.msra.mxu0 0.0
    %698 = vmatprep.subr.mxu0 0.0
    %699 = vmatpush1.msra.mxu0 0.0
    %700 = vmatprep.mubr.f32.mxu0 0.0
    %701 = vmatmul.mubr.f32.gmra.mrb[0].mxu0 %v633
    %v702 = vpop.f32.mrb[0].mxu0
    %v703 = vadd.f32 0.0, %v702
    %v704 = vpop.f32.mrb[0].mxu0
    %705 = vdwg.mxu0
    %v706 = vadd.f32 %v635, %v703
    %v707 = vtanh.pop %v706
    %s708 = scalar_lea.vmem [#allocation9], 56
    %709 = vst [vmem:[%s708] sm:$0xff] %v707
    %710 = vst [vmem:[#allocation2] sm:$0xff] %v707
    // Predicated region
    $region30: #{tpu_custom_call.1} parent=1 // pred_check
      %p711 = pneg %p59
    $region31: #{tpu_custom_call.1} parent=1 // pred_check_branch
      %713 = sbr.rel (%p711) target = $region33
    $region32: #{tpu_custom_call.1} parent=1 // pred_region
      %714 = vst [vmem:[#allocation10] sm:$0xff] %v707
    $region33: #{tpu_custom_call.1} parent=1 // pred_fallthru
      _
    // Predicated region
    $region34: #{tpu_custom_call.1} parent=1 // pred_check
      _
    $region35: #{tpu_custom_call.1} parent=1 // pred_check_branch
      %716 = sbr.rel (0) target = $region37
    $region36: #{tpu_custom_call.1} parent=1 // pred_region
      %s718 = ssub.s32 1024, 1024
      %719 = vsyncadd [#allocation5], %s718
      %s720 = sshll.u32 [#allocation9], 4
      %s721 = int_to_ptr.vmem [resolvable:$true] %s720
      %726 = dma.vmem_to_hbm [thread:$0]  %s721, 1024, %s3, [#allocation5], 128, 128, 8
    $region37: #{tpu_custom_call.1} parent=1 // pred_fallthru
      _
    // Predicated region
    $region38: #{tpu_custom_call.1} parent=1 // pred_check
      _
    $region39: #{tpu_custom_call.1} parent=1 // pred_check_branch
      %728 = sbr.rel (0) target = $region41
    $region40: #{tpu_custom_call.1} parent=1 // pred_region
      %s730 = ssub.s32 128, 128
      %731 = vsyncadd [#allocation11], %s730
      %s733 = sshll.u32 [#allocation10], 4
      %s734 = int_to_ptr.vmem [resolvable:$true] %s733
      %736 = dma.vmem_to_hbm [thread:$0]  %s734, 128, %s4, [#allocation11]
    $region41: #{tpu_custom_call.1} parent=1 // pred_fallthru
      _
    // Predicated region
    $region42: #{tpu_custom_call.1} parent=1 // pred_check
      _
    $region43: #{tpu_custom_call.1} parent=1 // pred_check_branch
      %738 = sbr.rel (0) target = $region45
    $region44: #{tpu_custom_call.1} parent=1 // pred_region
      %739 = dma.done [#allocation5], 1024
    $region45: #{tpu_custom_call.1} parent=1 // pred_fallthru
      _
    // Predicated region
    $region46: #{tpu_custom_call.1} parent=1 // pred_check
      _
    $region47: #{tpu_custom_call.1} parent=1 // pred_check_branch
      %741 = sbr.rel (0) target = $region49
    $region48: #{tpu_custom_call.1} parent=1 // pred_region
      %742 = dma.done [#allocation11], 128
    $region49: #{tpu_custom_call.1} parent=1 // pred_fallthru
      _
    %743 = vsyncpa [#allocation4], 1
    %744 = vsyncpa [#allocation7], 1
    %745 = vsyncpa [#allocation5], 1
    %746 = vsyncpa [#allocation11], 1

</llo_original>
